<compile_context>
chip_gen: v5e
topology: v5e:2x2
jax: 0.10.0
libtpu: 0.0.40
codegen_flags: <defaults>
</compile_context>

<pallas_src>
import functools

import jax
import jax.numpy as jnp
from jax.experimental import pallas as pl
from jax.experimental.pallas import tpu as pltpu

DROP_P = 0.1


def _round_up(v: int, m: int) -> int:
    return (v + m - 1) // m * m


def _nn_kernel(*refs, training: bool):
    # training:  (x_ref, w_ref, b_ref, rand_ref, o_ref, acc_ref)
    # eval:      (x_ref, w_ref, b_ref,           o_ref, acc_ref)
    if training:
        x_ref, w_ref, b_ref, rand_ref, o_ref, acc_ref = refs
    else:
        x_ref, w_ref, b_ref, o_ref, acc_ref = refs
        rand_ref = None

    k = pl.program_id(2)

    @pl.when(k == 0)
    def _():
        acc_ref[...] = jnp.zeros_like(acc_ref)

    # x tile: (tm, tk), w tile: (tn, tk) -> contract over K (axis 1 of both).
    acc_ref[...] += jax.lax.dot_general(
        x_ref[...], w_ref[...],
        dimension_numbers=(((1,), (1,)), ((), ())),
        preferred_element_type=jnp.float32,
    )

    @pl.when(k == pl.num_programs(2) - 1)
    def _():
        y = acc_ref[...] + b_ref[...]          # bias (broadcast over rows)
        y = jnp.maximum(y, 0.0)                # ReLU (forward uses F.relu)
        if training:
            keep = rand_ref[...] >= DROP_P     # keep with prob 1-p
            y = jnp.where(keep, y * (1.0 / (1.0 - DROP_P)), 0.0)
        o_ref[...] = y.astype(o_ref.dtype)


def nn_forward(x, w, b, *, key=None, training=True):
    """x: (M, K) f32, w: (N, K) f32 (torch nn.Linear layout), b: (N,) f32."""
    M, K = x.shape
    N = w.shape[0]

    # Tile sizes (lane axis >= 128, sublane multiple of 8), then pad array dims
    # to multiples of the tiles so every block is full / lane-dense.
    tm = min(_round_up(M, 8), 256)
    tn = min(_round_up(N, 128), 512)
    tk = min(_round_up(K, 128), 512)
    Mp, Np, Kp = _round_up(M, tm), _round_up(N, tn), _round_up(K, tk)

    xp = jnp.pad(x, ((0, Mp - M), (0, Kp - K)))
    wp = jnp.pad(w, ((0, Np - N), (0, Kp - K)))
    bp = jnp.pad(b, (0, Np - N)).reshape(1, Np)

    grid = (Mp // tm, Np // tn, Kp // tk)

    in_specs = [
        pl.BlockSpec((tm, tk), lambda i, j, k: (i, k)),   # x
        pl.BlockSpec((tn, tk), lambda i, j, k: (j, k)),   # W (N, K) -- no transpose
        pl.BlockSpec((1, tn), lambda i, j, k: (0, j)),    # bias row
    ]
    args = [xp, wp, bp]

    if training:
        if key is None:
            key = jax.random.PRNGKey(0)
        rand = jax.random.uniform(key, (Mp, Np), dtype=jnp.float32)
        in_specs.append(pl.BlockSpec((tm, tn), lambda i, j, k: (i, j)))
        args.append(rand)

    out = pl.pallas_call(
        functools.partial(_nn_kernel, training=training),
        out_shape=jax.ShapeDtypeStruct((Mp, Np), x.dtype),
        grid=grid,
        in_specs=in_specs,
        out_specs=pl.BlockSpec((tm, tn), lambda i, j, k: (i, j)),
        scratch_shapes=[pltpu.VMEM((tm, tn), jnp.float32)],
        compiler_params=pltpu.CompilerParams(
            dimension_semantics=("parallel", "parallel", "arbitrary"),
            vmem_limit_bytes=32 * 1024 * 1024,   # budgeted for v7x (64 MiB VMEM/TC) too
        ),
    )(*args)

    return out[:M, :N]


if __name__ == "__main__":
    in_dim, out_dim, batch = 32, 64, 8

    key = jax.random.PRNGKey(0)
    kx, kw, kb, kd = jax.random.split(key, 4)

    # Mimic nn.Linear uniform(-1/sqrt(fan_in), 1/sqrt(fan_in)) init.
    bound = 1.0 / (in_dim ** 0.5)
    w = jax.random.uniform(kw, (out_dim, in_dim), jnp.float32, -bound, bound)
    b = jax.random.uniform(kb, (out_dim,), jnp.float32, -bound, bound)
    x = jax.random.normal(kx, (batch, in_dim), dtype=jnp.float32)

    # Train mode (dropout active, like nn.Module default training=True).
    out_train = jax.block_until_ready(nn_forward(x, w, b, key=kd, training=True))

    # Eval mode (deterministic) vs. pure-JAX reference.
    out_eval = jax.block_until_ready(nn_forward(x, w, b, training=False))
    ref_eval = jnp.maximum(x @ w.T + b, 0.0)

    assert out_train.shape == (batch, out_dim)
    assert jnp.allclose(out_eval, ref_eval, atol=1e-5, rtol=1e-5)

    # Every train-mode element must be either dropped (0) or eval / (1-p).
    scaled = ref_eval / (1.0 - DROP_P)
    ok = jnp.isclose(out_train, 0.0, atol=1e-6) | jnp.isclose(out_train, scaled, atol=1e-4)
    assert bool(jnp.all(ok))

    print("KERNEL_OK")
</pallas_src>

<mosaic_0001>
module attributes {stable_mosaic.version = 11 : i64} {
  func.func @_nn_kernel(%arg0: i32, %arg1: i32, %arg2: i32, %arg3: memref<8x128xf32, #tpu.memory_space<vmem>>, %arg4: memref<128x128xf32, #tpu.memory_space<vmem>>, %arg5: memref<1x128xf32, #tpu.memory_space<vmem>>, %arg6: memref<8x128xf32, #tpu.memory_space<vmem>>, %arg7: memref<8x128xf32, #tpu.memory_space<vmem>>, %arg8: memref<8x128xf32, #tpu.memory_space<vmem>>) attributes {dimension_semantics = [#tpu.dimension_semantics<parallel>, #tpu.dimension_semantics<parallel>, #tpu.dimension_semantics<arbitrary>], iteration_bounds = array<i64: 1, 1, 1>, scalar_prefetch = 0 : i64, scratch_operands = 1 : i64, tpu.core_type = #tpu.core_type<tc>, window_params = [{transform_indices = @transform_0, window_bounds = array<i64: 8, 128>}, {transform_indices = @transform_1, window_bounds = array<i64: 128, 128>}, {transform_indices = @transform_2, window_bounds = array<i64: 1, 128>}, {transform_indices = @transform_3, window_bounds = array<i64: 8, 128>}, {transform_indices = @transform_4, window_bounds = array<i64: 8, 128>}]} {
    %c0_i32 = arith.constant 0 : i32
    %0 = arith.cmpi eq, %arg2, %c0_i32 : i32
    %1 = arith.extui %0 : i1 to i32
    %c0_i32_0 = arith.constant 0 : i32
    %2 = arith.cmpi ne, %1, %c0_i32_0 : i32
    scf.if %2 {
      %cst_10 = arith.constant 0.000000e+00 : f32
      %12 = vector.broadcast %cst_10 : f32 to vector<8x128xf32>
      %c0_11 = arith.constant 0 : index
      %c0_12 = arith.constant 0 : index
      %13 = vector.load %arg8[%c0_11, %c0_12] : memref<8x128xf32, #tpu.memory_space<vmem>>, vector<8x128xf32>
      tpu.vector_store %arg8[%c0_11, %c0_12], %12 {strides = array<i32>} : memref<8x128xf32, #tpu.memory_space<vmem>>, vector<8x128xf32>,
    } else {
    }
    %c0 = arith.constant 0 : index
    %c0_1 = arith.constant 0 : index
    %3 = vector.load %arg8[%c0, %c0_1] : memref<8x128xf32, #tpu.memory_space<vmem>>, vector<8x128xf32>
    %c0_2 = arith.constant 0 : index
    %c0_3 = arith.constant 0 : index
    %4 = vector.load %arg3[%c0_2, %c0_3] : memref<8x128xf32, #tpu.memory_space<vmem>>, vector<8x128xf32>
    %c0_4 = arith.constant 0 : index
    %c0_5 = arith.constant 0 : index
    %5 = vector.load %arg4[%c0_4, %c0_5] : memref<128x128xf32, #tpu.memory_space<vmem>>, vector<128x128xf32>
    %cst = arith.constant dense<0.000000e+00> : vector<8x128xf32>
    %6 = tpu.matmul %4, %5, %cst {dimension_numbers = #tpu.dot_dimension_numbers<[1], [1], [0], [0], [0, 0, 1, 0], [], []>} : vector<8x128xf32>, vector<128x128xf32>, vector<8x128xf32> -> vector<8x128xf32>
    %7 = arith.addf %3, %6 : vector<8x128xf32>
    %c0_6 = arith.constant 0 : index
    %c0_7 = arith.constant 0 : index
    %8 = vector.load %arg8[%c0_6, %c0_7] : memref<8x128xf32, #tpu.memory_space<vmem>>, vector<8x128xf32>
    tpu.vector_store %arg8[%c0_6, %c0_7], %7 {strides = array<i32>} : memref<8x128xf32, #tpu.memory_space<vmem>>, vector<8x128xf32>,
    %c0_i32_8 = arith.constant 0 : i32
    %9 = arith.cmpi eq, %arg2, %c0_i32_8 : i32
    %10 = arith.extui %9 : i1 to i32
    %c0_i32_9 = arith.constant 0 : i32
    %11 = arith.cmpi ne, %10, %c0_i32_9 : i32
    scf.if %11 {
      %c0_10 = arith.constant 0 : index
      %c0_11 = arith.constant 0 : index
      %12 = vector.load %arg8[%c0_10, %c0_11] : memref<8x128xf32, #tpu.memory_space<vmem>>, vector<8x128xf32>
      %c0_12 = arith.constant 0 : index
      %c0_13 = arith.constant 0 : index
      %13 = vector.load %arg5[%c0_12, %c0_13] : memref<1x128xf32, #tpu.memory_space<vmem>>, vector<1x128xf32>
      %14 = vector.broadcast %13 : vector<1x128xf32> to vector<8x128xf32>
      %15 = arith.addf %12, %14 : vector<8x128xf32>
      %cst_14 = arith.constant 0.000000e+00 : f32
      %16 = vector.broadcast %cst_14 : f32 to vector<8x128xf32>
      %17 = arith.maximumf %15, %16 : vector<8x128xf32>
      %c0_15 = arith.constant 0 : index
      %c0_16 = arith.constant 0 : index
      %18 = vector.load %arg6[%c0_15, %c0_16] : memref<8x128xf32, #tpu.memory_space<vmem>>, vector<8x128xf32>
      %cst_17 = arith.constant 1.000000e-01 : f32
      %19 = vector.broadcast %cst_17 : f32 to vector<8x128xf32>
      %20 = arith.cmpf oge, %18, %19 : vector<8x128xf32>
      %cst_18 = arith.constant 1.11111116 : f32
      %21 = vector.broadcast %cst_18 : f32 to vector<8x128xf32>
      %22 = arith.mulf %17, %21 : vector<8x128xf32>
      %cst_19 = arith.constant 0.000000e+00 : f32
      %23 = vector.broadcast %cst_19 : f32 to vector<8x128xf32>
      %24 = arith.select %20, %22, %23 : vector<8x128xi1>, vector<8x128xf32>
      %c0_20 = arith.constant 0 : index
      %c0_21 = arith.constant 0 : index
      %25 = vector.load %arg7[%c0_20, %c0_21] : memref<8x128xf32, #tpu.memory_space<vmem>>, vector<8x128xf32>
      tpu.vector_store %arg7[%c0_20, %c0_21], %24 {strides = array<i32>} : memref<8x128xf32, #tpu.memory_space<vmem>>, vector<8x128xf32>,
    } else {
    }
    return
  }
  func.func @transform_0(%arg0: i32, %arg1: i32, %arg2: i32) -> (i32, i32) {
    %c0_i32 = arith.constant 0 : i32
    return %arg0, %arg2 : i32, i32
  }
  func.func @transform_1(%arg0: i32, %arg1: i32, %arg2: i32) -> (i32, i32) {
    %c0_i32 = arith.constant 0 : i32
    return %arg1, %arg2 : i32, i32
  }
  func.func @transform_2(%arg0: i32, %arg1: i32, %arg2: i32) -> (i32, i32) {
    %c0_i32 = arith.constant 0 : i32
    %c0_i32_0 = arith.constant 0 : i32
    return %c0_i32, %arg1 : i32, i32
  }
  func.func @transform_3(%arg0: i32, %arg1: i32, %arg2: i32) -> (i32, i32) {
    %c0_i32 = arith.constant 0 : i32
    return %arg0, %arg1 : i32, i32
  }
  func.func @transform_4(%arg0: i32, %arg1: i32, %arg2: i32) -> (i32, i32) {
    %c0_i32 = arith.constant 0 : i32
    return %arg0, %arg1 : i32, i32
  }
}

</mosaic_0001>

<llo_original>
// kernel: tpu_custom_call.1
$region0: #{tpu_custom_call.1}
  #allocation0 [shape = 'u32[]', space=smem, size = 0x4, offset = 0x4, fixed_abs, tag = 'smem constant byte address 0x4 - core index']
  #allocation1 [shape = 'u32[72,128]{1,0:T(1,128)}', space=vmem, size = 0x9000, scoped, tag = 'internal scratch']
  #allocation2 [shape = 'f32[8,128]{1,0:T(8,128)}', space=vmem, size = 0x1000, scoped, tag = 'scratch operand']
  %s0 = inlined_call_operand.hbm [shape: f32[8,128], index: 0, kind: input, shape index: {}]
  %s1 = inlined_call_operand.hbm [shape: f32[128,128], index: 1, kind: input, shape index: {}]
  %s2 = inlined_call_operand.vmem [shape: f32[1,128], index: 2, kind: input, shape index: {}]
  %s3 = inlined_call_operand.hbm [shape: f32[8,128], index: 3, kind: input, shape index: {}]
  %s4 = inlined_call_operand.hbm [shape: f32[8,128], index: 4, kind: output, shape index: {}]
  %s5 = sld [smem:[#allocation0]]
  $region46: #{tpu_custom_call.1} parent=0
    _
  %s7 = ssub.s32 1, %s5
  %s8 = scalar_select 0, %s7, %s5
  $region1: #{tpu_custom_call.1} parent=0
    #allocation3 [shape = 'u8[4096]{0}', space=vmem, size = 0x1000, scoped, tag = 'input window, operand 0, single buffered']
    #allocation4 [shape = 's32[1]{0}', space=sflag, size = 0x4, scoped, tag = 'scoped memory for tpu_custom_call.1']
    #allocation5 [shape = 's32[1]{0}', space=sflag, size = 0x4, scoped, tag = 'scoped memory for tpu_custom_call.1']
    #allocation6 [shape = 'u8[65536]{0}', space=vmem, size = 0x10000, scoped, tag = 'input window, operand 1, single buffered']
    #allocation7 [shape = 's32[1]{0}', space=sflag, size = 0x4, scoped, tag = 'scoped memory for tpu_custom_call.1']
    #allocation8 [shape = 'u8[4096]{0}', space=vmem, size = 0x1000, scoped, tag = 'input window, operand 3, single buffered']
    #allocation9 [shape = 'u8[4096]{0}', space=vmem, size = 0x1000, scoped, tag = 'output window, operand 0, single buffered']
    %9 = vsyncpa [#allocation4], 0
    %10 = vsyncpa [#allocation7], 0
    %11 = vsyncpa [#allocation5], 0
    // Predicated region
    $region2: #{tpu_custom_call.1} parent=1 // pred_check
      _
    $region3: #{tpu_custom_call.1} parent=1 // pred_check_branch
      %13 = sbr.rel (0) target = $region5
    $region4: #{tpu_custom_call.1} parent=1 // pred_region
      %15 = vsyncadd [#allocation4], 0
      %s17 = sshll.u32 %s0, 4
      %s18 = int_to_ptr.hbm [resolvable:$true] %s17
      %s19 = sshll.u32 [#allocation3], 4
      %s20 = int_to_ptr.vmem [resolvable:$true] %s19
      %22 = dma.hbm_to_vmem [thread:$0]  %s18, 128, %s20, [#allocation4]
    $region5: #{tpu_custom_call.1} parent=1 // pred_fallthru
      _
    // Predicated region
    $region6: #{tpu_custom_call.1} parent=1 // pred_check
      _
    $region7: #{tpu_custom_call.1} parent=1 // pred_check_branch
      %24 = sbr.rel (0) target = $region9
    $region8: #{tpu_custom_call.1} parent=1 // pred_region
      %26 = vsyncadd [#allocation7], 0
      %s27 = sshll.u32 %s1, 4
      %s28 = int_to_ptr.hbm [resolvable:$true] %s27
      %s29 = sshll.u32 [#allocation6], 4
      %s30 = int_to_ptr.vmem [resolvable:$true] %s29
      %35 = dma.hbm_to_vmem [thread:$0]  %s28, 2048, %s30, [#allocation7], 128, 128, 8
    $region9: #{tpu_custom_call.1} parent=1 // pred_fallthru
      _
    // Predicated region
    $region10: #{tpu_custom_call.1} parent=1 // pred_check
      _
    $region11: #{tpu_custom_call.1} parent=1 // pred_check_branch
      %37 = sbr.rel (0) target = $region13
    $region12: #{tpu_custom_call.1} parent=1 // pred_region
      _
    $region13: #{tpu_custom_call.1} parent=1 // pred_fallthru
      _
    // Predicated region
    $region14: #{tpu_custom_call.1} parent=1 // pred_check
      _
    $region15: #{tpu_custom_call.1} parent=1 // pred_check_branch
      %39 = sbr.rel (0) target = $region17
    $region16: #{tpu_custom_call.1} parent=1 // pred_region
      %41 = vsyncadd [#allocation7], 0
      %s43 = sshll.u32 %s3, 4
      %s44 = int_to_ptr.hbm [resolvable:$true] %s43
      %s45 = sshll.u32 [#allocation8], 4
      %s46 = int_to_ptr.vmem [resolvable:$true] %s45
      %48 = dma.hbm_to_vmem [thread:$0]  %s44, 128, %s46, [#allocation7]
    $region17: #{tpu_custom_call.1} parent=1 // pred_fallthru
      _
    // Predicated region
    $region18: #{tpu_custom_call.1} parent=1 // pred_check
      _
    $region19: #{tpu_custom_call.1} parent=1 // pred_check_branch
      %50 = sbr.rel (0) target = $region21
    $region20: #{tpu_custom_call.1} parent=1 // pred_region
      %52 = dma.done [#allocation4], 128
    $region21: #{tpu_custom_call.1} parent=1 // pred_fallthru
      _
    // Predicated region
    $region22: #{tpu_custom_call.1} parent=1 // pred_check
      _
    $region23: #{tpu_custom_call.1} parent=1 // pred_check_branch
      %54 = sbr.rel (0) target = $region25
    $region24: #{tpu_custom_call.1} parent=1 // pred_region
      %56 = dma.done [#allocation7], 2048
    $region25: #{tpu_custom_call.1} parent=1 // pred_fallthru
      _
    // Predicated region
    $region26: #{tpu_custom_call.1} parent=1 // pred_check
      _
    $region27: #{tpu_custom_call.1} parent=1 // pred_check_branch
      %58 = sbr.rel (0) target = $region29
    $region28: #{tpu_custom_call.1} parent=1 // pred_region
      %60 = dma.done [#allocation7], 128
    $region29: #{tpu_custom_call.1} parent=1 // pred_fallthru
      _
    %p61 = scmp.eq.s32.totalorder 0, 0
    // Predicated region
    $region30: #{tpu_custom_call.1} parent=1 // pred_check
      %p62 = pneg %p61
    $region31: #{tpu_custom_call.1} parent=1 // pred_check_branch
      %64 = sbr.rel (%p62) target = $region33
    $region32: #{tpu_custom_call.1} parent=1 // pred_region
      %65 = vst [vmem:[#allocation2] sm:$0xff] 0.0
    $region33: #{tpu_custom_call.1} parent=1 // pred_fallthru
      _
    %v66 = vld [vmem:[#allocation2] sm:$0xff]
    %v67 = vld [vmem:[#allocation3] sm:$0xff]
    %v68 = vld [vmem:[#allocation6] sm:$0xff]
    %v69 = vld [vmem:[#allocation6 + $0x8] sm:$0xff]
    %v70 = vld [vmem:[#allocation6 + $0x10] sm:$0xff]
    %v71 = vld [vmem:[#allocation6 + $0x18] sm:$0xff]
    %v72 = vld [vmem:[#allocation6 + $0x20] sm:$0xff]
    %v73 = vld [vmem:[#allocation6 + $0x28] sm:$0xff]
    %v74 = vld [vmem:[#allocation6 + $0x30] sm:$0xff]
    %v75 = vld [vmem:[#allocation6 + $0x38] sm:$0xff]
    %v76 = vld [vmem:[#allocation6 + $0x40] sm:$0xff]
    %v77 = vld [vmem:[#allocation6 + $0x48] sm:$0xff]
    %v78 = vld [vmem:[#allocation6 + $0x50] sm:$0xff]
    %v79 = vld [vmem:[#allocation6 + $0x58] sm:$0xff]
    %v80 = vld [vmem:[#allocation6 + $0x60] sm:$0xff]
    %v81 = vld [vmem:[#allocation6 + $0x68] sm:$0xff]
    %v82 = vld [vmem:[#allocation6 + $0x70] sm:$0xff]
    %v83 = vld [vmem:[#allocation6 + $0x78] sm:$0xff]
    %84 = vmatpush.xpose.msra.mxu0 %v83
    %85 = vmatpush.xpose.msra.mxu0 %v82
    %86 = vmatpush.xpose.msra.mxu0 %v81
    %87 = vmatpush.xpose.msra.mxu0 %v80
    %88 = vmatpush.xpose.msra.mxu0 %v79
    %89 = vmatpush.xpose.msra.mxu0 %v78
    %90 = vmatpush.xpose.msra.mxu0 %v77
    %91 = vmatpush.xpose.msra.mxu0 %v76
    %92 = vmatpush.xpose.msra.mxu0 %v75
    %93 = vmatpush.xpose.msra.mxu0 %v74
    %94 = vmatpush.xpose.msra.mxu0 %v73
    %95 = vmatpush.xpose.msra.mxu0 %v72
    %96 = vmatpush.xpose.msra.mxu0 %v71
    %97 = vmatpush.xpose.msra.mxu0 %v70
    %98 = vmatpush.xpose.msra.mxu0 %v69
    %99 = vmatpush.xpose.msra.mxu0 %v68
    %100 = vmatmul.f32.gmra.mxu0 %v67
    %v101 = vpop.f32.mrf.mxu0
    %v102 = vadd.f32 0.0, %v101
    %103 = vdwg.mxu0
    %v104 = vadd.f32 %v66, %v102
    %105 = vst [vmem:[#allocation2] sm:$0xff] %v104
    // Predicated region
    $region34: #{tpu_custom_call.1} parent=1 // pred_check
      %p106 = pneg %p61
    $region35: #{tpu_custom_call.1} parent=1 // pred_check_branch
      %108 = sbr.rel (%p106) target = $region37
    $region36: #{tpu_custom_call.1} parent=1 // pred_region
      %v109 = vld [vmem:[#allocation2] sm:$0xff]
      %v110 = vld [vmem:[%s2] sm:$0x1]
      %v112 = vperm.slane %v110, 0
      %v114 = vadd.f32 %v109, %v112
      %v115 = vmax.f32 %v114, 0.0
      %v116 = vld [vmem:[#allocation8] sm:$0xff]
      %vm117 = vcmp.ge.f32.partialorder %v116, 0.1
      %v118 = vmul.f32 %v115, 1.1111112
      %v119 = vsel %vm117, %v118, 0.0
      %120 = vst [vmem:[#allocation9] sm:$0xff] %v119
    $region37: #{tpu_custom_call.1} parent=1 // pred_fallthru
      _
    // Predicated region
    $region38: #{tpu_custom_call.1} parent=1 // pred_check
      _
    $region39: #{tpu_custom_call.1} parent=1 // pred_check_branch
      %122 = sbr.rel (0) target = $region41
    $region40: #{tpu_custom_call.1} parent=1 // pred_region
      %124 = vsyncadd [#allocation5], 0
      %s126 = sshll.u32 [#allocation9], 4
      %s127 = int_to_ptr.vmem [resolvable:$true] %s126
      %s128 = sshll.u32 %s4, 4
      %s129 = int_to_ptr.hbm [resolvable:$true] %s128
      %131 = dma.vmem_to_hbm [thread:$0]  %s127, 128, %s129, [#allocation5]
    $region41: #{tpu_custom_call.1} parent=1 // pred_fallthru
      _
    // Predicated region
    $region42: #{tpu_custom_call.1} parent=1 // pred_check
      _
    $region43: #{tpu_custom_call.1} parent=1 // pred_check_branch
      %133 = sbr.rel (0) target = $region45
    $region44: #{tpu_custom_call.1} parent=1 // pred_region
      %135 = dma.done [#allocation5], 128
    $region45: #{tpu_custom_call.1} parent=1 // pred_fallthru
      _
    %136 = vsyncpa [#allocation4], 1
    %137 = vsyncpa [#allocation7], 1
    %138 = vsyncpa [#allocation5], 1

</llo_original>
